<compile_context>
chip_gen: v5e
topology: v5e:2x2
jax: 0.10.0
libtpu: 0.0.40
codegen_flags: <defaults>
</compile_context>

<pallas_src>
import math

import jax
import jax.numpy as jnp
from jax import lax
from jax.experimental import pallas as pl
from jax.experimental.pallas import tpu as pltpu

# bf16 matmul operands (f32 accumulate): deliberate accuracy/perf trade vs torch f32.
_MATMUL_DTYPE = jnp.bfloat16


def _tpu_vmem_capacity_bytes():
    try:
        return int(pltpu.get_tpu_info().vmem_capacity_bytes)
    except Exception:
        return 128 * 1024 * 1024  # v5e/v6e default


_VMEM_CAP_BYTES = _tpu_vmem_capacity_bytes()
# v5e/v6e (128 MiB physical) -> 48 MiB scoped; v7x (64 MiB physical) -> 40 MiB,
# leaving headroom for Mosaic internal scratch and double-buffered blocks.
_VMEM_LIMIT_BYTES = min(48 * 1024 * 1024, (_VMEM_CAP_BYTES * 5) // 8)


def _pick_tile(dim, target, align):
    """Largest tile <= target that is a multiple of `align` and divides `dim`.
    Falls back to the full dim (always a legal Mosaic block)."""
    if dim <= target:
        return dim
    t = (target // align) * align
    while t >= align:
        if dim % t == 0:
            return t
        t -= align
    return dim


# ---------------------------------------------------------------------------
# Tiled linear:  y = x @ W + b   (bf16 MXU operands, f32 accumulate)
# ---------------------------------------------------------------------------
def _linear_kernel_single_k(x_ref, w_ref, b_ref, o_ref):
    o_ref[...] = (jnp.dot(x_ref[...].astype(_MATMUL_DTYPE),
                          w_ref[...].astype(_MATMUL_DTYPE),
                          preferred_element_type=jnp.float32)
                  + b_ref[...]).astype(o_ref.dtype)


def _linear_kernel_multi_k(x_ref, w_ref, b_ref, o_ref, acc_ref):
    k = pl.program_id(2)

    @pl.when(k == 0)
    def _init():
        acc_ref[...] = jnp.zeros(acc_ref.shape, acc_ref.dtype)

    acc_ref[...] += jnp.dot(x_ref[...].astype(_MATMUL_DTYPE),
                            w_ref[...].astype(_MATMUL_DTYPE),
                            preferred_element_type=jnp.float32)

    @pl.when(k == pl.num_programs(2) - 1)
    def _finalize():
        o_ref[...] = (acc_ref[...] + b_ref[...]).astype(o_ref.dtype)


def linear(x2d, w, b, *, tm=256, tn=512, tk=2048):
    """x2d: (M, Din), w: (Din, Dout), b: (Dout,) -> (M, Dout), float32 in HBM."""
    M, Din = x2d.shape
    Dout = w.shape[1]
    tm = _pick_tile(M, tm, 8)
    tn = _pick_tile(Dout, tn, 128)
    # Large tk target: typical d_model fits one K block, eliminating the K grid
    # axis (no accumulator revisits, no pl.when init/finalize per output tile).
    tk = _pick_tile(Din, tk, 128)
    nk = Din // tk
    b2d = b.reshape(1, Dout)

    if nk == 1:
        grid = (M // tm, Dout // tn)
        in_specs = [
            pl.BlockSpec((tm, tk), lambda i, j: (i, 0)),
            pl.BlockSpec((tk, tn), lambda i, j: (0, j)),
            pl.BlockSpec((1, tn), lambda i, j: (0, j)),
        ]
        out_specs = pl.BlockSpec((tm, tn), lambda i, j: (i, j))
        kernel = _linear_kernel_single_k
        scratch = []
        semantics = ("parallel", "parallel")
    else:
        grid = (M // tm, Dout // tn, nk)
        in_specs = [
            pl.BlockSpec((tm, tk), lambda i, j, k: (i, k)),
            pl.BlockSpec((tk, tn), lambda i, j, k: (k, j)),
            pl.BlockSpec((1, tn), lambda i, j, k: (0, j)),
        ]
        out_specs = pl.BlockSpec((tm, tn), lambda i, j, k: (i, j))
        kernel = _linear_kernel_multi_k
        scratch = [pltpu.VMEM((tm, tn), jnp.float32)]
        semantics = ("parallel", "parallel", "arbitrary")

    return pl.pallas_call(
        kernel,
        out_shape=jax.ShapeDtypeStruct((M, Dout), jnp.float32),
        grid_spec=pltpu.PrefetchScalarGridSpec(
            num_scalar_prefetch=0,
            grid=grid,
            in_specs=in_specs,
            out_specs=out_specs,
            scratch_shapes=scratch,
        ),
        compiler_params=pltpu.CompilerParams(
            dimension_semantics=semantics,
            vmem_limit_bytes=_VMEM_LIMIT_BYTES,
        ),
    )(x2d, w, b2d)


# ---------------------------------------------------------------------------
# Flash-style multi-head attention (heads packed in the lane dimension)
# ---------------------------------------------------------------------------
def _make_mha_kernel(n_heads, head_dim, scale, with_mask):
    def kernel(*refs):
        if with_mask:
            mask_ref, q_ref, k_ref, v_ref, o_ref, m_sc, l_sc, acc_sc = refs
        else:
            q_ref, k_ref, v_ref, o_ref, m_sc, l_sc, acc_sc = refs
            mask_ref = None

        kv_i = pl.program_id(2)

        @pl.when(kv_i == 0)
        def _init():
            m_sc[...] = jnp.full(m_sc.shape, -jnp.inf, m_sc.dtype)
            l_sc[...] = jnp.zeros(l_sc.shape, l_sc.dtype)
            acc_sc[...] = jnp.zeros(acc_sc.shape, acc_sc.dtype)

        # Softmax scale folded into q once per kv step (cheaper than scaling every
        # per-head (sq_t, sk_t) score matrix); bf16 operands feed the MXU.
        qb = (q_ref[0] * scale).astype(_MATMUL_DTYPE)        # (sq_t, H*hd)
        kb = k_ref[0].astype(_MATMUL_DTYPE)                  # (sk_t, H*hd)
        vb = v_ref[0].astype(_MATMUL_DTYPE)                  # (sk_t, H*hd)
        sq_t = qb.shape[0]

        if with_mask:
            # Additive bias (torch masked_fill -1e9), computed once and shared by
            # every head: one compare+select per kv step instead of H.
            bias = jnp.where(mask_ref[0] == 0, jnp.float32(-1e9), jnp.float32(0.0))
        # TODO(synk): for causal masks, generate the mask in-kernel from
        # broadcasted_iota and skip kv tiles above the diagonal entirely.

        # m/l stats are stored lane-replicated at (sq_t, H*hd) so all scratch
        # updates below are single full-width lane-dense stores.
        m_prev = m_sc[...]
        l_prev = l_sc[...]

        m_new_parts, sum_parts, pv_parts = [], [], []
        # TODO(synk): for very large n_heads, move head groups onto a grid axis
        # to bound the live ranges of the statically unrolled temporaries.
        for h in range(n_heads):
            sl = slice(h * head_dim, (h + 1) * head_dim)
            q_h, k_h, v_h = qb[:, sl], kb[:, sl], vb[:, sl]

            # q . k^T contracting head_dim -- no explicit K transpose, bf16 MXU.
            s = lax.dot_general(q_h, k_h, (((1,), (1,)), ((), ())),
                                preferred_element_type=jnp.float32)   # (sq_t, sk_t)
            if with_mask:
                s = s + bias

            m_prev_h = m_prev[:, h * head_dim:h * head_dim + 1]       # (sq_t, 1)
            m_new_h = jnp.maximum(m_prev_h, jnp.max(s, axis=-1, keepdims=True))
            p = jnp.exp(s - m_new_h)                                  # f32
            sum_h = jnp.sum(p, axis=-1, keepdims=True)

            m_new_parts.append(jnp.broadcast_to(m_new_h, (sq_t, head_dim)))
            sum_parts.append(jnp.broadcast_to(sum_h, (sq_t, head_dim)))
            pv_parts.append(jnp.dot(p.astype(_MATMUL_DTYPE), v_h,
                                    preferred_element_type=jnp.float32))

        # Single full-width updates: no per-head masked RMW stores at
        # non-128-aligned lane offsets.
        m_new = jnp.concatenate(m_new_parts, axis=1)                  # (sq_t, H*hd)
        alpha = jnp.exp(m_prev - m_new)
        m_sc[...] = m_new
        l_sc[...] = alpha * l_prev + jnp.concatenate(sum_parts, axis=1)
        acc_sc[...] = alpha * acc_sc[...] + jnp.concatenate(pv_parts, axis=1)

        @pl.when(kv_i == pl.num_programs(2) - 1)
        def _finalize():
            l_all = l_sc[...]
            inv_l = pl.reciprocal(l_all, approx=True)     # EUP approx reciprocal
            inv_l = inv_l * (2.0 - l_all * inv_l)         # one NR step -> ~f32 accurate
            # One lane-dense (sq_t, H*hd) store: full vst, no masked partials.
            o_ref[0] = (acc_sc[...] * inv_l).astype(o_ref.dtype)

    return kernel


def flash_attention(q, k, v, *, n_heads, head_dim, mask=None,
                    q_tile=None, kv_tile=None, lane_blocks=(0, 0, 0)):
    """Flash-style MHA with heads packed in the lane dim.

    q: (B, Sq, >=HD), k/v: (B, Sk, >=HD).  q/k/v may all be the SAME packed
    (B, S, 3*HD) array addressed via `lane_blocks` (units of HD lanes), so the
    fused QKV projection output is consumed with zero slice copies.
    mask: optional (B, Sq, Sk), 0 == masked (torch masked_fill semantics).
    Returns (B, Sq, HD) with head h on lanes [h*hd, (h+1)*hd).
    """
    HD = n_heads * head_dim
    B, Sq = q.shape[0], q.shape[1]
    Sk = k.shape[1]
    scale = 1.0 / math.sqrt(head_dim)
    q_blk, k_blk, v_blk = lane_blocks
    for arr, blk in ((q, q_blk), (k, k_blk), (v, v_blk)):
        assert arr.shape[2] >= (blk + 1) * HD

    # Generation-aware tile defaults: bigger q tiles when VMEM is plentiful
    # (v5e/v6e, 128 MiB), smaller kv tiles for wide heads on v7x (64 MiB).
    big_vmem = _VMEM_CAP_BYTES >= 100 * 1024 * 1024
    if q_tile is None:
        q_tile = 512 if big_vmem else 256
    if kv_tile is None:
        kv_tile = 512
        if not big_vmem and HD >= 1024:
            kv_tile = 256

    sq_align = 32 if mask is not None else 8      # int8 mask blocks want 32-row sublanes
    sq_t = _pick_tile(Sq, q_tile, sq_align)
    sk_t = _pick_tile(Sk, kv_tile, 128)
    grid = (B, Sq // sq_t, Sk // sk_t)

    q_spec = pl.BlockSpec((1, sq_t, HD), lambda b, qi, ki, _blk=q_blk: (b, qi, _blk))
    k_spec = pl.BlockSpec((1, sk_t, HD), lambda b, qi, ki, _blk=k_blk: (b, ki, _blk))
    v_spec = pl.BlockSpec((1, sk_t, HD), lambda b, qi, ki, _blk=v_blk: (b, ki, _blk))
    o_spec = pl.BlockSpec((1, sq_t, HD), lambda b, qi, ki: (b, qi, 0))

    args = [q, k, v]
    in_specs = [q_spec, k_spec, v_spec]
    if mask is not None:
        # int8 mask: 4x less HBM traffic than int32 for the same information.
        args = [mask.astype(jnp.int8)] + args
        in_specs = [pl.BlockSpec((1, sq_t, sk_t), lambda b, qi, ki: (b, qi, ki))] + in_specs

    kernel = _make_mha_kernel(n_heads, head_dim, scale, mask is not None)

    return pl.pallas_call(
        kernel,
        out_shape=jax.ShapeDtypeStruct((B, Sq, HD), jnp.float32),
        grid_spec=pltpu.PrefetchScalarGridSpec(
            num_scalar_prefetch=0,
            grid=grid,
            in_specs=in_specs,
            out_specs=o_spec,
            scratch_shapes=[
                pltpu.VMEM((sq_t, HD), jnp.float32),   # running max (lane-replicated)
                pltpu.VMEM((sq_t, HD), jnp.float32),   # running sum (lane-replicated)
                pltpu.VMEM((sq_t, HD), jnp.float32),   # output accumulator
            ],
        ),
        compiler_params=pltpu.CompilerParams(
            # B and q-tile axes are 'parallel' (megacore-shardable on v7x);
            # the kv reduction axis stays last / 'arbitrary'.
            dimension_semantics=("parallel", "parallel", "arbitrary"),
            vmem_limit_bytes=_VMEM_LIMIT_BYTES,
        ),
    )(*args)


# ---------------------------------------------------------------------------
# MultiHeadAttention forward
# ---------------------------------------------------------------------------
def multi_head_attention(params, query, key, value, mask=None):
    """query/key/value: (B, S, d_model); mask: optional (B, Sq, Sk). -> (B, Sq, d_model)."""
    B, Sq, D = query.shape
    Sk = key.shape[1]
    H, hd = params["n_heads"], params["hidden"]
    HD = H * hd

    if query is key and key is value:
        # Self-attention: one fused QKV matmul (activation read once, 1 launch).
        qkv = linear(query.reshape(B * Sq, D), params["wqkv"], params["bqkv"])
        qkv = qkv.reshape(B, Sq, 3 * HD)
        if HD % 128 == 0:
            # Packed path: attention reads q/k/v directly out of the fused output
            # via lane-blocked BlockSpecs -- no XLA slice copies through HBM.
            z = flash_attention(qkv, qkv, qkv, n_heads=H, head_dim=hd, mask=mask,
                                lane_blocks=(0, 1, 2))
        else:
            # Lane-unaligned HD: fall back to explicit slices (extra HBM copies).
            z = flash_attention(qkv[:, :, :HD], qkv[:, :, HD:2 * HD], qkv[:, :, 2 * HD:],
                                n_heads=H, head_dim=hd, mask=mask)
    else:
        q = linear(query.reshape(B * Sq, D), params["wq"], params["bq"]).reshape(B, Sq, HD)
        k = linear(key.reshape(B * Sk, D), params["wk"], params["bk"]).reshape(B, Sk, HD)
        v = linear(value.reshape(B * Sk, D), params["wv"], params["bv"]).reshape(B, Sk, HD)
        z = flash_attention(q, k, v, n_heads=H, head_dim=hd, mask=mask)

    out = linear(z.reshape(B * Sq, HD), params["wo"], params["bo"])   # (B*Sq, D)
    return out.reshape(B, Sq, D)


def init_params(key, input_size, hidden_size, n_heads):
    """Deterministic nn.Linear-style init: U(-1/sqrt(fan_in), 1/sqrt(fan_in))."""
    proj = n_heads * hidden_size
    ks = jax.random.split(key, 8)

    def lin(kw, kb, fan_in, fan_out):
        bound = 1.0 / math.sqrt(fan_in)
        w = jax.random.uniform(kw, (fan_in, fan_out), jnp.float32, -bound, bound)
        b = jax.random.uniform(kb, (fan_out,), jnp.float32, -bound, bound)
        return w, b

    wq, bq = lin(ks[0], ks[1], input_size, proj)
    wk, bk = lin(ks[2], ks[3], input_size, proj)
    wv, bv = lin(ks[4], ks[5], input_size, proj)
    wo, bo = lin(ks[6], ks[7], proj, input_size)
    return dict(
        wq=wq, bq=bq, wk=wk, bk=bk, wv=wv, bv=bv, wo=wo, bo=bo,
        # pre-fused QKV weights for the self-attention fast path
        wqkv=jnp.concatenate([wq, wk, wv], axis=1),
        bqkv=jnp.concatenate([bq, bk, bv]),
        n_heads=n_heads, hidden=hidden_size,
    )


# ---------------------------------------------------------------------------
# Reference (pure JAX, f32) for sanity checking
# ---------------------------------------------------------------------------
def reference(params, query, key, value, mask=None):
    B, S, D = query.shape
    H, hd = params["n_heads"], params["hidden"]

    def proj(x, w, b):
        return (x @ w + b).reshape(B, -1, H, hd).transpose(0, 2, 1, 3)

    q = proj(query, params["wq"], params["bq"])
    k = proj(key, params["wk"], params["bk"])
    v = proj(value, params["wv"], params["bv"])
    s = jnp.einsum("bhqd,bhkd->bhqk", q, k) / math.sqrt(hd)
    if mask is not None:
        s = jnp.where(mask[:, None, :, :] == 0, -1e9, s)
    p = jax.nn.softmax(s, axis=-1)
    z = jnp.einsum("bhqk,bhkd->bhqd", p, v)
    z = z.transpose(0, 2, 1, 3).reshape(B, S, H * hd)
    return z @ params["wo"] + params["bo"]


if __name__ == "__main__":
    B, S = 2, 8
    input_size, hidden_size, n_heads = 32, 32, 4   # H*hd = 128 -> packed fast path

    root = jax.random.PRNGKey(0)
    kp, kq, kk, kv = jax.random.split(root, 4)
    params = init_params(kp, input_size, hidden_size, n_heads)

    query = jax.random.normal(kq, (B, S, input_size), jnp.float32)
    key = jax.random.normal(kk, (B, S, input_size), jnp.float32)
    value = jax.random.normal(kv, (B, S, input_size), jnp.float32)

    # bf16 matmul operands (f32 accumulate) vs. the pure-f32 reference:
    # tolerance covers bf16 operand rounding.
    TOL = dict(atol=3e-2, rtol=3e-2)

    # 1) cross-attention (distinct q/k/v, separate projections), no mask
    out = jax.block_until_ready(multi_head_attention(params, query, key, value))
    ref = reference(params, query, key, value)
    assert out.shape == (B, S, input_size)
    assert jnp.allclose(out, ref, **TOL), float(jnp.max(jnp.abs(out - ref)))

    # 2) self-attention (fused QKV + packed lane-blocked attention) with causal mask
    causal = jnp.tril(jnp.ones((B, S, S), jnp.int32))
    out_sa = jax.block_until_ready(
        multi_head_attention(params, query, query, query, mask=causal))
    ref_sa = reference(params, query, query, query, mask=causal)
    assert jnp.allclose(out_sa, ref_sa, **TOL), float(jnp.max(jnp.abs(out_sa - ref_sa)))

    print("KERNEL_OK")
</pallas_src>

<mosaic_0001>
module attributes {stable_mosaic.version = 11 : i64} {
  func.func @_linear_kernel_single_k(%arg0: i32, %arg1: i32, %arg2: memref<16x32xf32, #tpu.memory_space<vmem>>, %arg3: memref<32x128xf32, #tpu.memory_space<vmem>>, %arg4: memref<1x128xf32, #tpu.memory_space<vmem>>, %arg5: memref<16x128xf32, #tpu.memory_space<vmem>>) attributes {dimension_semantics = [#tpu.dimension_semantics<parallel>, #tpu.dimension_semantics<parallel>], iteration_bounds = array<i64: 1, 1>, scalar_prefetch = 0 : i64, scratch_operands = 0 : i64, tpu.core_type = #tpu.core_type<tc>, window_params = [{transform_indices = @transform_0, window_bounds = array<i64: 16, 32>}, {transform_indices = @transform_1, window_bounds = array<i64: 32, 128>}, {transform_indices = @transform_2, window_bounds = array<i64: 1, 128>}, {transform_indices = @transform_3, window_bounds = array<i64: 16, 128>}]} {
    %c0 = arith.constant 0 : index
    %c0_0 = arith.constant 0 : index
    %0 = vector.load %arg2[%c0, %c0_0] : memref<16x32xf32, #tpu.memory_space<vmem>>, vector<16x32xf32>
    %1 = arith.truncf %0 : vector<16x32xf32> to vector<16x32xbf16>
    %c0_1 = arith.constant 0 : index
    %c0_2 = arith.constant 0 : index
    %2 = vector.load %arg3[%c0_1, %c0_2] : memref<32x128xf32, #tpu.memory_space<vmem>>, vector<32x128xf32>
    %3 = arith.truncf %2 : vector<32x128xf32> to vector<32x128xbf16>
    %cst = arith.constant dense<0.000000e+00> : vector<16x128xf32>
    %4 = tpu.matmul %1, %3, %cst {dimension_numbers = #tpu.dot_dimension_numbers<[1], [0], [0], [1], [0, 0, 1, 1], [], []>} : vector<16x32xbf16>, vector<32x128xbf16>, vector<16x128xf32> -> vector<16x128xf32>
    %c0_3 = arith.constant 0 : index
    %c0_4 = arith.constant 0 : index
    %5 = vector.load %arg4[%c0_3, %c0_4] : memref<1x128xf32, #tpu.memory_space<vmem>>, vector<1x128xf32>
    %6 = vector.broadcast %5 : vector<1x128xf32> to vector<16x128xf32>
    %7 = arith.addf %4, %6 : vector<16x128xf32>
    %c0_5 = arith.constant 0 : index
    %c0_6 = arith.constant 0 : index
    %8 = vector.load %arg5[%c0_5, %c0_6] : memref<16x128xf32, #tpu.memory_space<vmem>>, vector<16x128xf32>
    tpu.vector_store %arg5[%c0_5, %c0_6], %7 {strides = array<i32>} : memref<16x128xf32, #tpu.memory_space<vmem>>, vector<16x128xf32>,
    return
  }
  func.func @transform_0(%arg0: i32, %arg1: i32) -> (i32, i32) {
    %c0_i32 = arith.constant 0 : i32
    %c0_i32_0 = arith.constant 0 : i32
    return %arg0, %c0_i32 : i32, i32
  }
  func.func @transform_1(%arg0: i32, %arg1: i32) -> (i32, i32) {
    %c0_i32 = arith.constant 0 : i32
    %c0_i32_0 = arith.constant 0 : i32
    return %c0_i32, %arg1 : i32, i32
  }
  func.func @transform_2(%arg0: i32, %arg1: i32) -> (i32, i32) {
    %c0_i32 = arith.constant 0 : i32
    %c0_i32_0 = arith.constant 0 : i32
    return %c0_i32, %arg1 : i32, i32
  }
  func.func @transform_3(%arg0: i32, %arg1: i32) -> (i32, i32) {
    %c0_i32 = arith.constant 0 : i32
    return %arg0, %arg1 : i32, i32
  }
}

</mosaic_0001>

<llo_original>
// kernel: tpu_custom_call.1
$region0: #{tpu_custom_call.1}
  #allocation0 [shape = 'u32[]', space=smem, size = 0x4, offset = 0x4, fixed_abs, tag = 'smem constant byte address 0x4 - core index']
  #allocation1 [shape = 'u32[72,128]{1,0:T(1,128)}', space=vmem, size = 0x9000, scoped, tag = 'internal scratch']
  %s0 = inlined_call_operand.hbm [shape: f32[16,32], index: 0, kind: input, shape index: {}]
  %s1 = inlined_call_operand.hbm [shape: f32[32,128], index: 1, kind: input, shape index: {}]
  %s2 = inlined_call_operand.vmem [shape: f32[1,128], index: 2, kind: input, shape index: {}]
  %s3 = inlined_call_operand.hbm [shape: f32[16,128], index: 3, kind: output, shape index: {}]
  %s4 = sld [smem:[#allocation0]]
  $region30: #{tpu_custom_call.1} parent=0
    _
  %s6 = ssub.s32 1, %s4
  %s7 = scalar_select 0, %s6, %s4
  $region1: #{tpu_custom_call.1} parent=0
    #allocation2 [shape = 'u8[8192]{0}', space=vmem, size = 0x2000, scoped, tag = 'input window, operand 0, single buffered']
    #allocation3 [shape = 's32[1]{0}', space=sflag, size = 0x4, scoped, tag = 'scoped memory for tpu_custom_call.1']
    #allocation4 [shape = 's32[1]{0}', space=sflag, size = 0x4, scoped, tag = 'scoped memory for tpu_custom_call.1']
    #allocation5 [shape = 'u8[16384]{0}', space=vmem, size = 0x4000, scoped, tag = 'input window, operand 1, single buffered']
    #allocation6 [shape = 's32[1]{0}', space=sflag, size = 0x4, scoped, tag = 'scoped memory for tpu_custom_call.1']
    #allocation7 [shape = 'u8[8192]{0}', space=vmem, size = 0x2000, scoped, tag = 'output window, operand 0, single buffered']
    %8 = vsyncpa [#allocation3], 0
    %9 = vsyncpa [#allocation6], 0
    %10 = vsyncpa [#allocation4], 0
    // Predicated region
    $region2: #{tpu_custom_call.1} parent=1 // pred_check
      _
    $region3: #{tpu_custom_call.1} parent=1 // pred_check_branch
      %12 = sbr.rel (0) target = $region5
    $region4: #{tpu_custom_call.1} parent=1 // pred_region
      %14 = vsyncadd [#allocation3], 0
      %s15 = sshll.u32 %s0, 4
      %s16 = int_to_ptr.hbm [resolvable:$true] %s15
      %s17 = sshll.u32 [#allocation2], 4
      %s18 = int_to_ptr.vmem [resolvable:$true] %s17
      %23 = dma.hbm_to_vmem [thread:$0]  %s16, 256, %s18, [#allocation3], 128, 128, 8
    $region5: #{tpu_custom_call.1} parent=1 // pred_fallthru
      _
    // Predicated region
    $region6: #{tpu_custom_call.1} parent=1 // pred_check
      _
    $region7: #{tpu_custom_call.1} parent=1 // pred_check_branch
      %25 = sbr.rel (0) target = $region9
    $region8: #{tpu_custom_call.1} parent=1 // pred_region
      %27 = vsyncadd [#allocation6], 0
      %s28 = sshll.u32 %s1, 4
      %s29 = int_to_ptr.hbm [resolvable:$true] %s28
      %s30 = sshll.u32 [#allocation5], 4
      %s31 = int_to_ptr.vmem [resolvable:$true] %s30
      %36 = dma.hbm_to_vmem [thread:$0]  %s29, 512, %s31, [#allocation6], 128, 128, 8
    $region9: #{tpu_custom_call.1} parent=1 // pred_fallthru
      _
    // Predicated region
    $region10: #{tpu_custom_call.1} parent=1 // pred_check
      _
    $region11: #{tpu_custom_call.1} parent=1 // pred_check_branch
      %38 = sbr.rel (0) target = $region13
    $region12: #{tpu_custom_call.1} parent=1 // pred_region
      _
    $region13: #{tpu_custom_call.1} parent=1 // pred_fallthru
      _
    // Predicated region
    $region14: #{tpu_custom_call.1} parent=1 // pred_check
      _
    $region15: #{tpu_custom_call.1} parent=1 // pred_check_branch
      %40 = sbr.rel (0) target = $region17
    $region16: #{tpu_custom_call.1} parent=1 // pred_region
      %42 = dma.done [#allocation3], 256
    $region17: #{tpu_custom_call.1} parent=1 // pred_fallthru
      _
    // Predicated region
    $region18: #{tpu_custom_call.1} parent=1 // pred_check
      _
    $region19: #{tpu_custom_call.1} parent=1 // pred_check_branch
      %44 = sbr.rel (0) target = $region21
    $region20: #{tpu_custom_call.1} parent=1 // pred_region
      %46 = dma.done [#allocation6], 512
    $region21: #{tpu_custom_call.1} parent=1 // pred_fallthru
      _
    %v48 = vld [vmem:[#allocation2] sm:$0xff]
    %v49 = vld [vmem:[#allocation2 + $0x8] sm:$0xff]
    %v50 = vpack.c.bf16 %v49, %v48
    %v51 = vld [vmem:[#allocation5] sm:$0xff]
    %v52 = vld [vmem:[#allocation5 + $0x8] sm:$0xff]
    %v53 = vld [vmem:[#allocation5 + $0x10] sm:$0xff]
    %v54 = vld [vmem:[#allocation5 + $0x18] sm:$0xff]
    %v55 = vpack.c.bf16 %v52, %v51
    %v56 = vpack.c.bf16 %v54, %v53
    %v57 = vld [vmem:[%s2] sm:$0x1]
    %v59 = vperm.slane %v57, 0
    %vm61 = vcmask 261120
    %v63 = vsel %vm61, %v50, 0
    %65 = vmatpush.bf16.msra.mxu0 0
    %66 = vmatpush.bf16.msra.mxu0 0
    %67 = vmatpush.bf16.msra.mxu0 0
    %68 = vmatpush.bf16.msra.mxu0 0
    %69 = vmatpush.bf16.msra.mxu0 0
    %70 = vmatpush.bf16.msra.mxu0 0
    %71 = vmatpush.bf16.msra.mxu0 %v56
    %72 = vmatpush.bf16.msra.mxu0 %v55
    %73 = vmatmul.bf16.gmra.mxu0 %v63
    %v74 = vpop.f32.mrf.mxu0
    %v75 = vadd.f32 %v59, %v74
    %v76 = vpop.f32.mrf.mxu0
    %v77 = vadd.f32 %v59, %v76
    %78 = vdwg.mxu0
    %79 = vst [vmem:[#allocation7] sm:$0xff] %v75
    %80 = vst [vmem:[#allocation7 + $0x8] sm:$0xff] %v77
    // Predicated region
    $region22: #{tpu_custom_call.1} parent=1 // pred_check
      _
    $region23: #{tpu_custom_call.1} parent=1 // pred_check_branch
      %82 = sbr.rel (0) target = $region25
    $region24: #{tpu_custom_call.1} parent=1 // pred_region
      %84 = vsyncadd [#allocation4], 0
      %s85 = sshll.u32 [#allocation7], 4
      %s86 = int_to_ptr.vmem [resolvable:$true] %s85
      %s87 = sshll.u32 %s3, 4
      %s88 = int_to_ptr.hbm [resolvable:$true] %s87
      %93 = dma.vmem_to_hbm [thread:$0]  %s86, 256, %s88, [#allocation4], 128, 128, 8
    $region25: #{tpu_custom_call.1} parent=1 // pred_fallthru
      _
    // Predicated region
    $region26: #{tpu_custom_call.1} parent=1 // pred_check
      _
    $region27: #{tpu_custom_call.1} parent=1 // pred_check_branch
      %95 = sbr.rel (0) target = $region29
    $region28: #{tpu_custom_call.1} parent=1 // pred_region
      %97 = dma.done [#allocation4], 256
    $region29: #{tpu_custom_call.1} parent=1 // pred_fallthru
      _
    %98 = vsyncpa [#allocation3], 1
    %99 = vsyncpa [#allocation6], 1
    %100 = vsyncpa [#allocation4], 1

</llo_original>
